<compile_context>
chip_gen: v7x
topology: tpu7x:2x2x1
jax: 0.10.0
libtpu: 0.0.40
codegen_flags: <defaults>
</compile_context>

<pallas_src>
import functools

import jax
import jax.numpy as jnp
from jax.experimental import pallas as pl
from jax.experimental.pallas import tpu as pltpu


def _visual_embed_kernel(x_ref, wfc_ref, bfc_ref, w0_ref, b0_ref,
                         w1_ref, b1_ref, o_ref, *, tb, kp):
    # x_ref block: (tb*kp, D) f32 rows = tb batches x kp selected tokens.
    x = x_ref[...]                                                  # (M, D)

    # l2norm over D (same eps placement as the torch reference);
    # the reciprocal goes to the EUP slot instead of a VPU divide.
    norm = jnp.sqrt(jnp.sum(x * x, axis=-1, keepdims=True)) + 1e-8
    x = x * pl.reciprocal(norm, approx=True)

    xb = x.astype(jnp.bfloat16)                                     # MXU input

    # fc branch: Linear(D -> E), f32 accumulation.
    fc = jnp.dot(xb, wfc_ref[...], preferred_element_type=jnp.float32)
    fc = fc + bfc_ref[...]

    # mlp branch: Linear(D -> H) -> BN(eval; scale pre-folded into w0/b0)
    #             -> ReLU -> Linear(H -> E).
    h = jnp.dot(xb, w0_ref[...], preferred_element_type=jnp.float32)
    h = jnp.maximum(h + b0_ref[...], 0.0).astype(jnp.bfloat16)
    mlp = jnp.dot(h, w1_ref[...], preferred_element_type=jnp.float32)
    mlp = mlp + b1_ref[...]

    feat = fc + mlp                                                 # (M, E) f32
    e = feat.shape[-1]
    # Per-batch max over the kp tokens (maxk_pool1d_var with k=1, full lengths).
    # kp is a multiple of 8, so this reshape is a clean sublane re-tiling.
    feat = feat.reshape(tb, kp, e)
    o_ref[...] = jnp.max(feat, axis=1)                              # (tb, E)


def visual_embedding_forward(base_features, atten, params, ratio=0.3):
    """JAX/Pallas equivalent of VisualEmbeddingLayer.forward."""
    B, N, D = base_features.shape
    k = max(int((atten.shape[1] - 1) * ratio), 1)   # guard degenerate k == 0
    E = params["w_fc"].shape[1]
    H = params["w0"].shape[1]

    # ---- glue (data-dependent selection), mirrors the PyTorch reference ----
    atten = atten.at[:, :, 0].set(-1.0)
    _, top_idx = jax.lax.top_k(atten[:, 0, :], k)                   # (B, k)
    idx = jnp.broadcast_to(top_idx[:, :, None], (B, k, D))
    gathered = jnp.take_along_axis(base_features, idx, axis=1)      # (B, k, D)

    # Pad tokens to the sublane granule with duplicated valid rows (max-safe),
    # and pad batches so each grid step handles TB batches (MXU-sized slab).
    kp = ((k + 7) // 8) * 8
    b_pad8 = ((B + 7) // 8) * 8
    # TB must be a multiple of 8 (output block (TB, E) sublane rule); target
    # ~512 rows of MXU work per grid step.
    tb = min(b_pad8, max(8, (512 // kp) // 8 * 8))
    grid_b = -(-B // tb)
    bp = grid_b * tb
    gathered = jnp.pad(gathered, ((0, bp - B), (0, kp - k), (0, 0)), mode="edge")
    x2d = gathered.reshape(bp * kp, D).astype(jnp.float32)

    # Fold BN eval scale into the first mlp layer; bf16 weights for the MXU,
    # biases stay f32.
    bn_scale = 1.0 / jnp.sqrt(jnp.float32(1.0) + 1e-5)
    w_fc = params["w_fc"].astype(jnp.bfloat16)
    w0 = (params["w0"] * bn_scale).astype(jnp.bfloat16)
    b0 = (params["b0"] * bn_scale).astype(jnp.float32)
    w1 = params["w1"].astype(jnp.bfloat16)

    out = pl.pallas_call(
        functools.partial(_visual_embed_kernel, tb=tb, kp=kp),
        out_shape=jax.ShapeDtypeStruct((bp, E), jnp.float32),
        grid_spec=pltpu.PrefetchScalarGridSpec(
            num_scalar_prefetch=0,
            grid=(grid_b,),
            in_specs=[
                pl.BlockSpec((tb * kp, D), lambda b: (b, 0)),       # token slab
                pl.BlockSpec((D, E), lambda b: (0, 0)),             # w_fc (bf16)
                pl.BlockSpec((1, E), lambda b: (0, 0)),             # b_fc
                pl.BlockSpec((D, H), lambda b: (0, 0)),             # w0 (bf16, BN folded)
                pl.BlockSpec((1, H), lambda b: (0, 0)),             # b0 (BN folded)
                pl.BlockSpec((H, E), lambda b: (0, 0)),             # w1 (bf16)
                pl.BlockSpec((1, E), lambda b: (0, 0)),             # b1
            ],
            out_specs=pl.BlockSpec((tb, E), lambda b: (b, 0)),
        ),
        compiler_params=pltpu.CompilerParams(
            dimension_semantics=("parallel",)),
    )(x2d, w_fc, params["b_fc"], w0, b0, w1, params["b1"])

    return out[:B]                                                   # (B, E) f32


def visual_embedding_reference(base_features, atten, params, ratio=0.3):
    """Pure-JAX f32 reference (same math, no bf16/approx-recip)."""
    B, N, D = base_features.shape
    k = max(int((atten.shape[1] - 1) * ratio), 1)
    atten = atten.at[:, :, 0].set(-1.0)
    _, top_idx = jax.lax.top_k(atten[:, 0, :], k)
    idx = jnp.broadcast_to(top_idx[:, :, None], (B, k, D))
    x = jnp.take_along_axis(base_features, idx, axis=1)             # (B, k, D)
    norm = jnp.sqrt(jnp.sum(x * x, axis=-1, keepdims=True)) + 1e-8
    x = x / norm
    fc = x @ params["w_fc"] + params["b_fc"]
    bn_scale = 1.0 / jnp.sqrt(jnp.float32(1.0) + 1e-5)
    h = jnp.maximum((x @ params["w0"] + params["b0"]) * bn_scale, 0.0)
    mlp = h @ params["w1"] + params["b1"]
    return jnp.max(fc + mlp, axis=1)                                # (B, E)


def init_params(key, input_dim, embed_dim):
    """Deterministic synthetic parameters (PyTorch-Linear-style uniform init)."""
    hidden = embed_dim // 2
    ks = jax.random.split(key, 6)

    def lin(kw, kb, fan_in, fan_out):
        bound = 1.0 / jnp.sqrt(jnp.float32(fan_in))
        w = jax.random.uniform(kw, (fan_in, fan_out), jnp.float32, -bound, bound)
        b = jax.random.uniform(kb, (1, fan_out), jnp.float32, -bound, bound)
        return w, b

    w_fc, b_fc = lin(ks[0], ks[1], input_dim, embed_dim)   # self.fc
    w0, b0 = lin(ks[2], ks[3], input_dim, hidden)          # mlp.layers[0]
    w1, b1 = lin(ks[4], ks[5], hidden, embed_dim)          # mlp.layers[1]
    return dict(w_fc=w_fc, b_fc=b_fc, w0=w0, b0=b0, w1=w1, b1=b1)


if __name__ == "__main__":
    key = jax.random.PRNGKey(0)
    k_feat, k_att, k_par = jax.random.split(key, 3)

    # Small shapes consistent with the module's forward:
    #   base_features: (B, N, input_dim), atten: (B, N, N)
    B, N, D, E = 2, 16, 32, 64          # input_dim=32, embed_dim=64, hidden=32
    ratio = 0.3                         # k = int((16 - 1) * 0.3) = 4 selected tokens

    base_features = jax.random.normal(k_feat, (B, N, D), jnp.float32)
    atten = jax.random.uniform(k_att, (B, N, N), jnp.float32)
    params = init_params(k_par, D, E)

    out = visual_embedding_forward(base_features, atten, params, ratio=ratio)
    out = jax.block_until_ready(out)

    assert out.shape == (B, E), out.shape
    assert out.dtype == jnp.float32, out.dtype

    # Loose tolerance: kernel runs the matmuls in bf16 and uses the approximate
    # EUP reciprocal for the l2norm, the reference is pure f32.
    ref = visual_embedding_reference(base_features, atten, params, ratio=ratio)
    assert jnp.allclose(out, ref, atol=5e-2, rtol=5e-2), \
        float(jnp.max(jnp.abs(out - ref)))

    print("KERNEL_OK")
</pallas_src>

<mosaic_0001>
module attributes {stable_mosaic.version = 11 : i64} {
  func.func @_visual_embed_kernel(%arg0: i32, %arg1: memref<64x32xf32, #tpu.memory_space<vmem>>, %arg2: memref<32x64xbf16, #tpu.memory_space<vmem>>, %arg3: memref<1x64xf32, #tpu.memory_space<vmem>>, %arg4: memref<32x32xbf16, #tpu.memory_space<vmem>>, %arg5: memref<1x32xf32, #tpu.memory_space<vmem>>, %arg6: memref<32x64xbf16, #tpu.memory_space<vmem>>, %arg7: memref<1x64xf32, #tpu.memory_space<vmem>>, %arg8: memref<8x64xf32, #tpu.memory_space<vmem>>) attributes {dimension_semantics = [#tpu.dimension_semantics<parallel>], iteration_bounds = array<i64: 1>, scalar_prefetch = 0 : i64, scratch_operands = 0 : i64, tpu.core_type = #tpu.core_type<tc>, window_params = [{transform_indices = @transform_0, window_bounds = array<i64: 64, 32>}, {pipeline_mode = #tpu.pipeline_mode<synchronous>, transform_indices = @transform_1, window_bounds = array<i64: 32, 64>}, {pipeline_mode = #tpu.pipeline_mode<synchronous>, transform_indices = @transform_2, window_bounds = array<i64: 1, 64>}, {pipeline_mode = #tpu.pipeline_mode<synchronous>, transform_indices = @transform_3, window_bounds = array<i64: 32, 32>}, {pipeline_mode = #tpu.pipeline_mode<synchronous>, transform_indices = @transform_4, window_bounds = array<i64: 1, 32>}, {pipeline_mode = #tpu.pipeline_mode<synchronous>, transform_indices = @transform_5, window_bounds = array<i64: 32, 64>}, {pipeline_mode = #tpu.pipeline_mode<synchronous>, transform_indices = @transform_6, window_bounds = array<i64: 1, 64>}, {transform_indices = @transform_7, window_bounds = array<i64: 8, 64>}]} {
    %c0 = arith.constant 0 : index
    %c0_0 = arith.constant 0 : index
    %0 = vector.load %arg1[%c0, %c0_0] : memref<64x32xf32, #tpu.memory_space<vmem>>, vector<64x32xf32>
    %1 = arith.mulf %0, %0 : vector<64x32xf32>
    %cst = arith.constant dense<0.000000e+00> : vector<64xf32>
    %2 = vector.multi_reduction <add>, %1, %cst [1] : vector<64x32xf32> to vector<64xf32>
    %3 = vector.shape_cast %2 : vector<64xf32> to vector<64x1xf32>
    %4 = math.sqrt %3 : vector<64x1xf32>
    %cst_1 = arith.constant 9.99999993E-9 : f32
    %5 = vector.broadcast %cst_1 : f32 to vector<64x1xf32>
    %6 = arith.addf %4, %5 : vector<64x1xf32>
    %7 = tpu.reciprocal %6 {approx = true} : vector<64x1xf32> -> vector<64x1xf32>
    %8 = vector.broadcast %7 : vector<64x1xf32> to vector<64x32xf32>
    %9 = arith.mulf %0, %8 : vector<64x32xf32>
    %10 = arith.truncf %9 : vector<64x32xf32> to vector<64x32xbf16>
    %c0_2 = arith.constant 0 : index
    %c0_3 = arith.constant 0 : index
    %11 = vector.load %arg2[%c0_2, %c0_3] : memref<32x64xbf16, #tpu.memory_space<vmem>>, vector<32x64xbf16>
    %cst_4 = arith.constant dense<0.000000e+00> : vector<64x64xf32>
    %12 = tpu.matmul %10, %11, %cst_4 {dimension_numbers = #tpu.dot_dimension_numbers<[1], [0], [0], [1], [0, 0, 1, 1], [], []>} : vector<64x32xbf16>, vector<32x64xbf16>, vector<64x64xf32> -> vector<64x64xf32>
    %c0_5 = arith.constant 0 : index
    %c0_6 = arith.constant 0 : index
    %13 = vector.load %arg3[%c0_5, %c0_6] : memref<1x64xf32, #tpu.memory_space<vmem>>, vector<1x64xf32>
    %14 = vector.broadcast %13 : vector<1x64xf32> to vector<64x64xf32>
    %15 = arith.addf %12, %14 : vector<64x64xf32>
    %c0_7 = arith.constant 0 : index
    %c0_8 = arith.constant 0 : index
    %16 = vector.load %arg4[%c0_7, %c0_8] : memref<32x32xbf16, #tpu.memory_space<vmem>>, vector<32x32xbf16>
    %cst_9 = arith.constant dense<0.000000e+00> : vector<64x32xf32>
    %17 = tpu.matmul %10, %16, %cst_9 {dimension_numbers = #tpu.dot_dimension_numbers<[1], [0], [0], [1], [0, 0, 1, 1], [], []>} : vector<64x32xbf16>, vector<32x32xbf16>, vector<64x32xf32> -> vector<64x32xf32>
    %c0_10 = arith.constant 0 : index
    %c0_11 = arith.constant 0 : index
    %18 = vector.load %arg5[%c0_10, %c0_11] : memref<1x32xf32, #tpu.memory_space<vmem>>, vector<1x32xf32>
    %19 = vector.broadcast %18 : vector<1x32xf32> to vector<64x32xf32>
    %20 = arith.addf %17, %19 : vector<64x32xf32>
    %cst_12 = arith.constant 0.000000e+00 : f32
    %21 = vector.broadcast %cst_12 : f32 to vector<64x32xf32>
    %22 = arith.maximumf %20, %21 : vector<64x32xf32>
    %23 = arith.truncf %22 : vector<64x32xf32> to vector<64x32xbf16>
    %c0_13 = arith.constant 0 : index
    %c0_14 = arith.constant 0 : index
    %24 = vector.load %arg6[%c0_13, %c0_14] : memref<32x64xbf16, #tpu.memory_space<vmem>>, vector<32x64xbf16>
    %cst_15 = arith.constant dense<0.000000e+00> : vector<64x64xf32>
    %25 = tpu.matmul %23, %24, %cst_15 {dimension_numbers = #tpu.dot_dimension_numbers<[1], [0], [0], [1], [0, 0, 1, 1], [], []>} : vector<64x32xbf16>, vector<32x64xbf16>, vector<64x64xf32> -> vector<64x64xf32>
    %c0_16 = arith.constant 0 : index
    %c0_17 = arith.constant 0 : index
    %26 = vector.load %arg7[%c0_16, %c0_17] : memref<1x64xf32, #tpu.memory_space<vmem>>, vector<1x64xf32>
    %27 = vector.broadcast %26 : vector<1x64xf32> to vector<64x64xf32>
    %28 = arith.addf %25, %27 : vector<64x64xf32>
    %29 = arith.addf %15, %28 : vector<64x64xf32>
    %30 = vector.shape_cast %29 : vector<64x64xf32> to vector<8x8x64xf32>
    %cst_18 = arith.constant dense<0xFF800000> : vector<8x64xf32>
    %31 = vector.multi_reduction <maximumf>, %30, %cst_18 [1] : vector<8x8x64xf32> to vector<8x64xf32>
    %c0_19 = arith.constant 0 : index
    %c0_20 = arith.constant 0 : index
    %32 = vector.load %arg8[%c0_19, %c0_20] : memref<8x64xf32, #tpu.memory_space<vmem>>, vector<8x64xf32>
    tpu.vector_store %arg8[%c0_19, %c0_20], %31 {strides = array<i32>} : memref<8x64xf32, #tpu.memory_space<vmem>>, vector<8x64xf32>,
    return
  }
  func.func @transform_0(%arg0: i32) -> (i32, i32) {
    %c0_i32 = arith.constant 0 : i32
    %c0_i32_0 = arith.constant 0 : i32
    return %arg0, %c0_i32 : i32, i32
  }
  func.func @transform_1(%arg0: i32) -> (i32, i32) {
    %c0_i32 = arith.constant 0 : i32
    %c0_i32_0 = arith.constant 0 : i32
    %c0_i32_1 = arith.constant 0 : i32
    return %c0_i32, %c0_i32_0 : i32, i32
  }
  func.func @transform_2(%arg0: i32) -> (i32, i32) {
    %c0_i32 = arith.constant 0 : i32
    %c0_i32_0 = arith.constant 0 : i32
    %c0_i32_1 = arith.constant 0 : i32
    return %c0_i32, %c0_i32_0 : i32, i32
  }
  func.func @transform_3(%arg0: i32) -> (i32, i32) {
    %c0_i32 = arith.constant 0 : i32
    %c0_i32_0 = arith.constant 0 : i32
    %c0_i32_1 = arith.constant 0 : i32
    return %c0_i32, %c0_i32_0 : i32, i32
  }
  func.func @transform_4(%arg0: i32) -> (i32, i32) {
    %c0_i32 = arith.constant 0 : i32
    %c0_i32_0 = arith.constant 0 : i32
    %c0_i32_1 = arith.constant 0 : i32
    return %c0_i32, %c0_i32_0 : i32, i32
  }
  func.func @transform_5(%arg0: i32) -> (i32, i32) {
    %c0_i32 = arith.constant 0 : i32
    %c0_i32_0 = arith.constant 0 : i32
    %c0_i32_1 = arith.constant 0 : i32
    return %c0_i32, %c0_i32_0 : i32, i32
  }
  func.func @transform_6(%arg0: i32) -> (i32, i32) {
    %c0_i32 = arith.constant 0 : i32
    %c0_i32_0 = arith.constant 0 : i32
    %c0_i32_1 = arith.constant 0 : i32
    return %c0_i32, %c0_i32_0 : i32, i32
  }
  func.func @transform_7(%arg0: i32) -> (i32, i32) {
    %c0_i32 = arith.constant 0 : i32
    %c0_i32_0 = arith.constant 0 : i32
    return %arg0, %c0_i32 : i32, i32
  }
}

</mosaic_0001>

<llo_original>
// kernel: tpu_custom_call.1
$region0: #{tpu_custom_call.1}
  #allocation0 [shape = 'u32[]', space=smem, size = 0x4, offset = 0x4, fixed_abs, tag = 'smem constant byte address 0x4 - core index']
  #allocation1 [shape = 'u32[144,128]{1,0:T(1,128)}', space=vmem, size = 0x12000, scoped, tag = 'internal scratch']
  %s0 = inlined_call_operand.vmem [shape: f32[64,32], index: 0, kind: input, shape index: {}]
  %s1 = inlined_call_operand.vmem [shape: bf16[32,64], index: 1, kind: input, shape index: {}]
  %s2 = inlined_call_operand.vmem [shape: f32[1,64], index: 2, kind: input, shape index: {}]
  %s3 = inlined_call_operand.vmem [shape: bf16[32,32], index: 3, kind: input, shape index: {}]
  %s4 = inlined_call_operand.vmem [shape: f32[1,32], index: 4, kind: input, shape index: {}]
  %s5 = inlined_call_operand.vmem [shape: bf16[32,64], index: 5, kind: input, shape index: {}]
  %s6 = inlined_call_operand.vmem [shape: f32[1,64], index: 6, kind: input, shape index: {}]
  %s7 = inlined_call_operand.hbm [shape: f32[8,64], index: 7, kind: output, shape index: {}]
  %s8 = sld [smem:[#allocation0]]
  $region38: #{tpu_custom_call.1} parent=0
    _
  %s10 = ssub.s32 1, %s8
  %s11 = scalar_select 0, %s10, %s8
  $region1: #{tpu_custom_call.1} parent=0
    #allocation2 [shape = 'u8[4096]{0}', space=vmem, size = 0x1000, scoped, tag = 'output window, operand 0, single buffered']
    #allocation3 [shape = 's32[1]{0}', space=sflag, size = 0x4, scoped, tag = 'scoped memory for tpu_custom_call.1']
    %12 = vsyncpa [#allocation3], 0
    // Predicated region
    $region2: #{tpu_custom_call.1} parent=1 // pred_check
      _
    $region3: #{tpu_custom_call.1} parent=1 // pred_check_branch
      %14 = sbr.rel (0) target = $region5
    $region4: #{tpu_custom_call.1} parent=1 // pred_region
      _
    $region5: #{tpu_custom_call.1} parent=1 // pred_fallthru
      _
    // Predicated region
    $region6: #{tpu_custom_call.1} parent=1 // pred_check
      _
    $region7: #{tpu_custom_call.1} parent=1 // pred_check_branch
      %16 = sbr.rel (0) target = $region9
    $region8: #{tpu_custom_call.1} parent=1 // pred_region
      _
    $region9: #{tpu_custom_call.1} parent=1 // pred_fallthru
      _
    // Predicated region
    $region10: #{tpu_custom_call.1} parent=1 // pred_check
      _
    $region11: #{tpu_custom_call.1} parent=1 // pred_check_branch
      %18 = sbr.rel (0) target = $region13
    $region12: #{tpu_custom_call.1} parent=1 // pred_region
      _
    $region13: #{tpu_custom_call.1} parent=1 // pred_fallthru
      _
    // Predicated region
    $region14: #{tpu_custom_call.1} parent=1 // pred_check
      _
    $region15: #{tpu_custom_call.1} parent=1 // pred_check_branch
      %20 = sbr.rel (0) target = $region17
    $region16: #{tpu_custom_call.1} parent=1 // pred_region
      _
    $region17: #{tpu_custom_call.1} parent=1 // pred_fallthru
      _
    // Predicated region
    $region18: #{tpu_custom_call.1} parent=1 // pred_check
      _
    $region19: #{tpu_custom_call.1} parent=1 // pred_check_branch
      %22 = sbr.rel (0) target = $region21
    $region20: #{tpu_custom_call.1} parent=1 // pred_region
      _
    $region21: #{tpu_custom_call.1} parent=1 // pred_fallthru
      _
    // Predicated region
    $region22: #{tpu_custom_call.1} parent=1 // pred_check
      _
    $region23: #{tpu_custom_call.1} parent=1 // pred_check_branch
      %24 = sbr.rel (0) target = $region25
    $region24: #{tpu_custom_call.1} parent=1 // pred_region
      _
    $region25: #{tpu_custom_call.1} parent=1 // pred_fallthru
      _
    // Predicated region
    $region26: #{tpu_custom_call.1} parent=1 // pred_check
      _
    $region27: #{tpu_custom_call.1} parent=1 // pred_check_branch
      %26 = sbr.rel (0) target = $region29
    $region28: #{tpu_custom_call.1} parent=1 // pred_region
      _
    $region29: #{tpu_custom_call.1} parent=1 // pred_fallthru
      _
    %v28 = vld [vmem:[%s0] sm:$0xff]
    %v29 = vld [vmem:[%s0 + $0x8] sm:$0xff]
    %v30 = vld [vmem:[%s0 + $0x10] sm:$0xff]
    %v31 = vld [vmem:[%s0 + $0x18] sm:$0xff]
    %v32 = vld [vmem:[%s0 + $0x20] sm:$0xff]
    %v33 = vld [vmem:[%s0 + $0x28] sm:$0xff]
    %v34 = vld [vmem:[%s0 + $0x30] sm:$0xff]
    %v35 = vld [vmem:[%s0 + $0x38] sm:$0xff]
    %v36 = vmul.f32 %v28, %v28
    %v37 = vmul.f32 %v29, %v29
    %v38 = vmul.f32 %v30, %v30
    %v39 = vmul.f32 %v31, %v31
    %v40 = vmul.f32 %v32, %v32
    %v41 = vmul.f32 %v33, %v33
    %v42 = vmul.f32 %v34, %v34
    %v43 = vmul.f32 %v35, %v35
    %vm44 = vcmask 261120
    %v45 = vsel %vm44, %v36, 0.0
    %46 = vadd.xlane.f32.xlu0 %v45
    %v47 = vpop.xlane.xlu0 %46
    %v48 = vsel %vm44, %v37, 0.0
    %49 = vadd.xlane.f32.xlu0 %v48
    %v50 = vpop.xlane.xlu0 %49
    %v51 = vsel %vm44, %v38, 0.0
    %52 = vadd.xlane.f32.xlu0 %v51
    %v53 = vpop.xlane.xlu0 %52
    %v54 = vsel %vm44, %v39, 0.0
    %55 = vadd.xlane.f32.xlu0 %v54
    %v56 = vpop.xlane.xlu0 %55
    %v57 = vsel %vm44, %v40, 0.0
    %58 = vadd.xlane.f32.xlu0 %v57
    %v59 = vpop.xlane.xlu0 %58
    %v60 = vsel %vm44, %v41, 0.0
    %61 = vadd.xlane.f32.xlu0 %v60
    %v62 = vpop.xlane.xlu0 %61
    %v63 = vsel %vm44, %v42, 0.0
    %64 = vadd.xlane.f32.xlu0 %v63
    %v65 = vpop.xlane.xlu0 %64
    %v66 = vsel %vm44, %v43, 0.0
    %67 = vadd.xlane.f32.xlu0 %v66
    %v68 = vpop.xlane.xlu0 %67
    %v69 = vrsqrt.pop %v47
    %v70 = vmul.f32 %v47, %v69
    %vm71 = vcmp.eq.f32.partialorder %v47, inf
    %v72 = vsel %vm71, %v47, %v70
    %vm73 = vcmp.eq.f32.partialorder %v47, 0.0
    %v74 = vand.u32 %v47, 2147483648
    %v75 = vsel %vm73, %v74, %v72
    %v76 = vrsqrt.pop %v50
    %v77 = vmul.f32 %v50, %v76
    %vm78 = vcmp.eq.f32.partialorder %v50, inf
    %v79 = vsel %vm78, %v50, %v77
    %vm80 = vcmp.eq.f32.partialorder %v50, 0.0
    %v81 = vand.u32 %v50, 2147483648
    %v82 = vsel %vm80, %v81, %v79
    %v83 = vrsqrt.pop %v53
    %v84 = vmul.f32 %v53, %v83
    %vm85 = vcmp.eq.f32.partialorder %v53, inf
    %v86 = vsel %vm85, %v53, %v84
    %vm87 = vcmp.eq.f32.partialorder %v53, 0.0
    %v88 = vand.u32 %v53, 2147483648
    %v89 = vsel %vm87, %v88, %v86
    %v90 = vrsqrt.pop %v56
    %v91 = vmul.f32 %v56, %v90
    %vm92 = vcmp.eq.f32.partialorder %v56, inf
    %v93 = vsel %vm92, %v56, %v91
    %vm94 = vcmp.eq.f32.partialorder %v56, 0.0
    %v95 = vand.u32 %v56, 2147483648
    %v96 = vsel %vm94, %v95, %v93
    %v97 = vrsqrt.pop %v59
    %v98 = vmul.f32 %v59, %v97
    %vm99 = vcmp.eq.f32.partialorder %v59, inf
    %v100 = vsel %vm99, %v59, %v98
    %vm101 = vcmp.eq.f32.partialorder %v59, 0.0
    %v102 = vand.u32 %v59, 2147483648
    %v103 = vsel %vm101, %v102, %v100
    %v104 = vrsqrt.pop %v62
    %v105 = vmul.f32 %v62, %v104
    %vm106 = vcmp.eq.f32.partialorder %v62, inf
    %v107 = vsel %vm106, %v62, %v105
    %vm108 = vcmp.eq.f32.partialorder %v62, 0.0
    %v109 = vand.u32 %v62, 2147483648
    %v110 = vsel %vm108, %v109, %v107
    %v111 = vrsqrt.pop %v65
    %v112 = vmul.f32 %v65, %v111
    %vm113 = vcmp.eq.f32.partialorder %v65, inf
    %v114 = vsel %vm113, %v65, %v112
    %vm115 = vcmp.eq.f32.partialorder %v65, 0.0
    %v116 = vand.u32 %v65, 2147483648
    %v117 = vsel %vm115, %v116, %v114
    %v118 = vrsqrt.pop %v68
    %v119 = vmul.f32 %v68, %v118
    %vm120 = vcmp.eq.f32.partialorder %v68, inf
    %v121 = vsel %vm120, %v68, %v119
    %vm122 = vcmp.eq.f32.partialorder %v68, 0.0
    %v123 = vand.u32 %v68, 2147483648
    %v124 = vsel %vm122, %v123, %v121
    %v125 = vadd.f32 %v75, 1e-08
    %v126 = vadd.f32 %v82, 1e-08
    %v127 = vadd.f32 %v89, 1e-08
    %v128 = vadd.f32 %v96, 1e-08
    %v129 = vadd.f32 %v103, 1e-08
    %v130 = vadd.f32 %v110, 1e-08
    %v131 = vadd.f32 %v117, 1e-08
    %v132 = vadd.f32 %v124, 1e-08
    %v133 = vrcp.pop %v125
    %v134 = vrcp.pop %v126
    %v135 = vrcp.pop %v127
    %v136 = vrcp.pop %v128
    %v137 = vrcp.pop %v129
    %v138 = vrcp.pop %v130
    %v139 = vrcp.pop %v131
    %v140 = vrcp.pop %v132
    %v141 = vmul.f32 %v28, %v133
    %v142 = vmul.f32 %v29, %v134
    %v143 = vmul.f32 %v30, %v135
    %v144 = vmul.f32 %v31, %v136
    %v145 = vmul.f32 %v32, %v137
    %v146 = vmul.f32 %v33, %v138
    %v147 = vmul.f32 %v34, %v139
    %v148 = vmul.f32 %v35, %v140
    %v149 = vpack.c.bf16 %v142, %v141
    %v150 = vpack.c.bf16 %v144, %v143
    %v151 = vpack.c.bf16 %v146, %v145
    %v152 = vpack.c.bf16 %v148, %v147
    %v153 = vld [vmem:[%s1] sm:$0xf]
    %v154 = vld [vmem:[%s1 + $0x4] sm:$0xf]
    %v155 = vld [vmem:[%s1 + $0x8] sm:$0xf]
    %v156 = vld [vmem:[%s1 + $0xc] sm:$0xf]
    %v157 = vld [vmem:[%s2] sm:$0x1]
    %v159 = vlaneseq
    %v160 = vshrl.u32 %v159, 7
    %v161 = vsub.s32 0, %v160
    %v162 = vrot.slane %v157, %v161
    %v168 = vunpack.c.l.b16 %v153
    %v169 = vunpack.c.l.b16 %v154
    %v170 = vunpack.c.l.b16 %v155
    %v171 = vunpack.c.l.b16 %v156
    %v172 = vpack.c.b16 %v169, %v168
    %v173 = vpack.c.b16 %v171, %v170
    %v177 = vsel %vm44, %v149, 0
    %v180 = vsel %vm44, %v150, 0
    %v183 = vsel %vm44, %v151, 0
    %v186 = vsel %vm44, %v152, 0
    %188 = vmatprep.subr.bf16.mxu0 0
    %189 = vmatpush1.bf16.msra.mxu0 %v172
    %190 = vmatprep.subr.bf16.mxu0 0
    %191 = vmatpush1.bf16.msra.mxu0 %v173
    %192 = vmatprep.subr.bf16.mxu0 0
    %193 = vmatpush1.bf16.msra.mxu0 0
    %194 = vmatprep.subr.bf16.mxu0 0
    %195 = vmatpush1.bf16.msra.mxu0 0
    %196 = vmatprep.subr.bf16.mxu0 0
    %197 = vmatpush1.bf16.msra.mxu0 0
    %198 = vmatprep.subr.bf16.mxu0 0
    %199 = vmatpush1.bf16.msra.mxu0 0
    %200 = vmatprep.subr.bf16.mxu0 0
    %201 = vmatpush1.bf16.msra.mxu0 0
    %202 = vmatprep.subr.bf16.mxu0 0
    %203 = vmatpush1.bf16.msra.mxu0 0
    %204 = vmatprep.subr.bf16.mxu0 0
    %205 = vmatpush1.bf16.msra.mxu0 0
    %206 = vmatprep.subr.bf16.mxu0 0
    %207 = vmatpush1.bf16.msra.mxu0 0
    %208 = vmatprep.subr.bf16.mxu0 0
    %209 = vmatpush1.bf16.msra.mxu0 0
    %210 = vmatprep.subr.bf16.mxu0 0
    %211 = vmatpush1.bf16.msra.mxu0 0
    %212 = vmatprep.subr.bf16.mxu0 0
    %213 = vmatpush1.bf16.msra.mxu0 0
    %214 = vmatprep.subr.bf16.mxu0 0
    %215 = vmatpush1.bf16.msra.mxu0 0
    %216 = vmatprep.subr.bf16.mxu0 0
    %217 = vmatpush1.bf16.msra.mxu0 0
    %218 = vmatprep.subr.bf16.mxu0 0
    %219 = vmatpush1.bf16.msra.mxu0 0
    %220 = vmatprep.mubr.bf16.mxu0 0
    %221 = vmatmul.mubr.bf16.gmra.mrb[0].mxu0 %v177
    %v222 = vpop.f32.mrb[0].mxu0
    %v223 = vadd.f32 %v162, %v222
    %v224 = vpop.f32.mrb[0].mxu0
    %v225 = vpop.f32.mrb[0].mxu0
    %v226 = vadd.f32 %v162, %v225
    %v227 = vpop.f32.mrb[0].mxu0
    %228 = vmatprep.mubr.bf16.mxu0 0
    %229 = vmatmul.mubr.bf16.gmra.mrb[0].mxu0 %v180
    %v230 = vpop.f32.mrb[0].mxu0
    %v231 = vadd.f32 %v162, %v230
    %v232 = vpop.f32.mrb[0].mxu0
    %v233 = vpop.f32.mrb[0].mxu0
    %v234 = vadd.f32 %v162, %v233
    %v235 = vpop.f32.mrb[0].mxu0
    %236 = vmatprep.mubr.bf16.mxu0 0
    %237 = vmatmul.mubr.bf16.gmra.mrb[0].mxu0 %v183
    %v238 = vpop.f32.mrb[0].mxu0
    %v239 = vadd.f32 %v162, %v238
    %v240 = vpop.f32.mrb[0].mxu0
    %v241 = vpop.f32.mrb[0].mxu0
    %v242 = vadd.f32 %v162, %v241
    %v243 = vpop.f32.mrb[0].mxu0
    %244 = vmatprep.mubr.bf16.mxu0 0
    %245 = vmatmul.mubr.bf16.gmra.mrb[0].mxu0 %v186
    %v246 = vpop.f32.mrb[0].mxu0
    %v247 = vadd.f32 %v162, %v246
    %v248 = vpop.f32.mrb[0].mxu0
    %v249 = vpop.f32.mrb[0].mxu0
    %v250 = vadd.f32 %v162, %v249
    %v251 = vpop.f32.mrb[0].mxu0
    %252 = vdwg.mxu0
    %v253 = vld [vmem:[%s3] sm:$0xf]
    %v254 = vld [vmem:[%s3 + $0x4] sm:$0xf]
    %v255 = vld [vmem:[%s3 + $0x8] sm:$0xf]
    %v256 = vld [vmem:[%s3 + $0xc] sm:$0xf]
    %v257 = vld [vmem:[%s4] sm:$0x1]
    %v259 = vlaneseq
    %v260 = vshrl.u32 %v259, 7
    %v261 = vsub.s32 0, %v260
    %v262 = vrot.slane %v257, %v261
    %v268 = vunpack.c.l.b16 %v253
    %v269 = vunpack.c.l.b16 %v254
    %v270 = vunpack.c.l.b16 %v255
    %v271 = vunpack.c.l.b16 %v256
    %v272 = vpack.c.b16 %v269, %v268
    %v273 = vpack.c.b16 %v271, %v270
    %276 = vmatprep.subr.bf16.mxu0 0
    %277 = vmatpush1.bf16.msra.mxu0 %v272
    %278 = vmatprep.subr.bf16.mxu0 0
    %279 = vmatpush1.bf16.msra.mxu0 %v273
    %280 = vmatprep.subr.bf16.mxu0 0
    %281 = vmatpush1.bf16.msra.mxu0 0
    %282 = vmatprep.subr.bf16.mxu0 0
    %283 = vmatpush1.bf16.msra.mxu0 0
    %284 = vmatprep.subr.bf16.mxu0 0
    %285 = vmatpush1.bf16.msra.mxu0 0
    %286 = vmatprep.subr.bf16.mxu0 0
    %287 = vmatpush1.bf16.msra.mxu0 0
    %288 = vmatprep.subr.bf16.mxu0 0
    %289 = vmatpush1.bf16.msra.mxu0 0
    %290 = vmatprep.subr.bf16.mxu0 0
    %291 = vmatpush1.bf16.msra.mxu0 0
    %292 = vmatprep.subr.bf16.mxu0 0
    %293 = vmatpush1.bf16.msra.mxu0 0
    %294 = vmatprep.subr.bf16.mxu0 0
    %295 = vmatpush1.bf16.msra.mxu0 0
    %296 = vmatprep.subr.bf16.mxu0 0
    %297 = vmatpush1.bf16.msra.mxu0 0
    %298 = vmatprep.subr.bf16.mxu0 0
    %299 = vmatpush1.bf16.msra.mxu0 0
    %300 = vmatprep.subr.bf16.mxu0 0
    %301 = vmatpush1.bf16.msra.mxu0 0
    %302 = vmatprep.subr.bf16.mxu0 0
    %303 = vmatpush1.bf16.msra.mxu0 0
    %304 = vmatprep.subr.bf16.mxu0 0
    %305 = vmatpush1.bf16.msra.mxu0 0
    %306 = vmatprep.subr.bf16.mxu0 0
    %307 = vmatpush1.bf16.msra.mxu0 0
    %308 = vmatprep.mubr.bf16.mxu0 0
    %309 = vmatmul.mubr.bf16.gmra.mrb[0].mxu0 %v177
    %v310 = vpop.f32.mrb[0].mxu0
    %v311 = vadd.f32 %v262, %v310
    %v312 = vpop.f32.mrb[0].mxu0
    %v313 = vpop.f32.mrb[0].mxu0
    %v314 = vadd.f32 %v262, %v313
    %v315 = vpop.f32.mrb[0].mxu0
    %316 = vmatprep.mubr.bf16.mxu0 0
    %317 = vmatmul.mubr.bf16.gmra.mrb[0].mxu0 %v180
    %v318 = vpop.f32.mrb[0].mxu0
    %v319 = vadd.f32 %v262, %v318
    %v320 = vpop.f32.mrb[0].mxu0
    %v321 = vpop.f32.mrb[0].mxu0
    %v322 = vadd.f32 %v262, %v321
    %v323 = vpop.f32.mrb[0].mxu0
    %324 = vmatprep.mubr.bf16.mxu0 0
    %325 = vmatmul.mubr.bf16.gmra.mrb[0].mxu0 %v183
    %v326 = vpop.f32.mrb[0].mxu0
    %v327 = vadd.f32 %v262, %v326
    %v328 = vpop.f32.mrb[0].mxu0
    %v329 = vpop.f32.mrb[0].mxu0
    %v330 = vadd.f32 %v262, %v329
    %v331 = vpop.f32.mrb[0].mxu0
    %332 = vmatprep.mubr.bf16.mxu0 0
    %333 = vmatmul.mubr.bf16.gmra.mrb[0].mxu0 %v186
    %v334 = vpop.f32.mrb[0].mxu0
    %v335 = vadd.f32 %v262, %v334
    %v336 = vpop.f32.mrb[0].mxu0
    %v337 = vpop.f32.mrb[0].mxu0
    %v338 = vadd.f32 %v262, %v337
    %v339 = vpop.f32.mrb[0].mxu0
    %340 = vdwg.mxu0
    %v341 = vmax.f32 %v311, 0.0
    %v342 = vmax.f32 %v314, 0.0
    %v343 = vmax.f32 %v319, 0.0
    %v344 = vmax.f32 %v322, 0.0
    %v345 = vmax.f32 %v327, 0.0
    %v346 = vmax.f32 %v330, 0.0
    %v347 = vmax.f32 %v335, 0.0
    %v348 = vmax.f32 %v338, 0.0
    %v349 = vpack.c.bf16 %v342, %v341
    %v350 = vpack.c.bf16 %v344, %v343
    %v351 = vpack.c.bf16 %v346, %v345
    %v352 = vpack.c.bf16 %v348, %v347
    %v353 = vld [vmem:[%s5] sm:$0xf]
    %v354 = vld [vmem:[%s5 + $0x4] sm:$0xf]
    %v355 = vld [vmem:[%s5 + $0x8] sm:$0xf]
    %v356 = vld [vmem:[%s5 + $0xc] sm:$0xf]
    %v357 = vld [vmem:[%s6] sm:$0x1]
    %v359 = vlaneseq
    %v360 = vshrl.u32 %v359, 7
    %v361 = vsub.s32 0, %v360
    %v362 = vrot.slane %v357, %v361
    %v368 = vunpack.c.l.b16 %v353
    %v369 = vunpack.c.l.b16 %v354
    %v370 = vunpack.c.l.b16 %v355
    %v371 = vunpack.c.l.b16 %v356
    %v372 = vpack.c.b16 %v369, %v368
    %v373 = vpack.c.b16 %v371, %v370
    %v377 = vsel %vm44, %v349, 0
    %v380 = vsel %vm44, %v350, 0
    %v383 = vsel %vm44, %v351, 0
    %v386 = vsel %vm44, %v352, 0
    %388 = vmatprep.subr.bf16.mxu0 0
    %389 = vmatpush1.bf16.msra.mxu0 %v372
    %390 = vmatprep.subr.bf16.mxu0 0
    %391 = vmatpush1.bf16.msra.mxu0 %v373
    %392 = vmatprep.subr.bf16.mxu0 0
    %393 = vmatpush1.bf16.msra.mxu0 0
    %394 = vmatprep.subr.bf16.mxu0 0
    %395 = vmatpush1.bf16.msra.mxu0 0
    %396 = vmatprep.subr.bf16.mxu0 0
    %397 = vmatpush1.bf16.msra.mxu0 0
    %398 = vmatprep.subr.bf16.mxu0 0
    %399 = vmatpush1.bf16.msra.mxu0 0
    %400 = vmatprep.subr.bf16.mxu0 0
    %401 = vmatpush1.bf16.msra.mxu0 0
    %402 = vmatprep.subr.bf16.mxu0 0
    %403 = vmatpush1.bf16.msra.mxu0 0
    %404 = vmatprep.subr.bf16.mxu0 0
    %405 = vmatpush1.bf16.msra.mxu0 0
    %406 = vmatprep.subr.bf16.mxu0 0
    %407 = vmatpush1.bf16.msra.mxu0 0
    %408 = vmatprep.subr.bf16.mxu0 0
    %409 = vmatpush1.bf16.msra.mxu0 0
    %410 = vmatprep.subr.bf16.mxu0 0
    %411 = vmatpush1.bf16.msra.mxu0 0
    %412 = vmatprep.subr.bf16.mxu0 0
    %413 = vmatpush1.bf16.msra.mxu0 0
    %414 = vmatprep.subr.bf16.mxu0 0
    %415 = vmatpush1.bf16.msra.mxu0 0
    %416 = vmatprep.subr.bf16.mxu0 0
    %417 = vmatpush1.bf16.msra.mxu0 0
    %418 = vmatprep.subr.bf16.mxu0 0
    %419 = vmatpush1.bf16.msra.mxu0 0
    %420 = vmatprep.mubr.bf16.mxu0 0
    %421 = vmatmul.mubr.bf16.gmra.mrb[0].mxu0 %v377
    %v422 = vpop.f32.mrb[0].mxu0
    %v423 = vadd.f32 %v362, %v422
    %v424 = vpop.f32.mrb[0].mxu0
    %v425 = vpop.f32.mrb[0].mxu0
    %v426 = vadd.f32 %v362, %v425
    %v427 = vpop.f32.mrb[0].mxu0
    %428 = vmatprep.mubr.bf16.mxu0 0
    %429 = vmatmul.mubr.bf16.gmra.mrb[0].mxu0 %v380
    %v430 = vpop.f32.mrb[0].mxu0
    %v431 = vadd.f32 %v362, %v430
    %v432 = vpop.f32.mrb[0].mxu0
    %v433 = vpop.f32.mrb[0].mxu0
    %v434 = vadd.f32 %v362, %v433
    %v435 = vpop.f32.mrb[0].mxu0
    %436 = vmatprep.mubr.bf16.mxu0 0
    %437 = vmatmul.mubr.bf16.gmra.mrb[0].mxu0 %v383
    %v438 = vpop.f32.mrb[0].mxu0
    %v439 = vadd.f32 %v362, %v438
    %v440 = vpop.f32.mrb[0].mxu0
    %v441 = vpop.f32.mrb[0].mxu0
    %v442 = vadd.f32 %v362, %v441
    %v443 = vpop.f32.mrb[0].mxu0
    %444 = vmatprep.mubr.bf16.mxu0 0
    %445 = vmatmul.mubr.bf16.gmra.mrb[0].mxu0 %v386
    %v446 = vpop.f32.mrb[0].mxu0
    %v447 = vadd.f32 %v362, %v446
    %v448 = vpop.f32.mrb[0].mxu0
    %v449 = vpop.f32.mrb[0].mxu0
    %v450 = vadd.f32 %v362, %v449
    %v451 = vpop.f32.mrb[0].mxu0
    %452 = vdwg.mxu0
    %v453 = vadd.f32 %v223, %v423
    %v454 = vadd.f32 %v226, %v426
    %v455 = vadd.f32 %v231, %v431
    %v456 = vadd.f32 %v234, %v434
    %v457 = vadd.f32 %v239, %v439
    %v458 = vadd.f32 %v242, %v442
    %v459 = vadd.f32 %v247, %v447
    %v460 = vadd.f32 %v250, %v450
    %vm461 = vcmask 523264
    %v462 = vsel %vm461, %v453, -inf
    %v463 = vrot.slane %v462, 4
    %v464 = vmax.f32 %v462, %v463
    %v465 = vrot.slane %v464, 2
    %v466 = vmax.f32 %v464, %v465
    %v467 = vrot.slane %v466, 1
    %v468 = vmax.f32 %v466, %v467
    %v469 = vsel %vm461, %v454, -inf
    %v470 = vrot.slane %v469, 4
    %v471 = vmax.f32 %v469, %v470
    %v472 = vrot.slane %v471, 2
    %v473 = vmax.f32 %v471, %v472
    %v474 = vrot.slane %v473, 1
    %v475 = vmax.f32 %v473, %v474
    %v476 = vsel %vm461, %v455, -inf
    %v477 = vrot.slane %v476, 4
    %v478 = vmax.f32 %v476, %v477
    %v479 = vrot.slane %v478, 2
    %v480 = vmax.f32 %v478, %v479
    %v481 = vrot.slane %v480, 1
    %v482 = vmax.f32 %v480, %v481
    %v483 = vsel %vm461, %v456, -inf
    %v484 = vrot.slane %v483, 4
    %v485 = vmax.f32 %v483, %v484
    %v486 = vrot.slane %v485, 2
    %v487 = vmax.f32 %v485, %v486
    %v488 = vrot.slane %v487, 1
    %v489 = vmax.f32 %v487, %v488
    %v490 = vsel %vm461, %v457, -inf
    %v491 = vrot.slane %v490, 4
    %v492 = vmax.f32 %v490, %v491
    %v493 = vrot.slane %v492, 2
    %v494 = vmax.f32 %v492, %v493
    %v495 = vrot.slane %v494, 1
    %v496 = vmax.f32 %v494, %v495
    %v497 = vsel %vm461, %v458, -inf
    %v498 = vrot.slane %v497, 4
    %v499 = vmax.f32 %v497, %v498
    %v500 = vrot.slane %v499, 2
    %v501 = vmax.f32 %v499, %v500
    %v502 = vrot.slane %v501, 1
    %v503 = vmax.f32 %v501, %v502
    %v504 = vsel %vm461, %v459, -inf
    %v505 = vrot.slane %v504, 4
    %v506 = vmax.f32 %v504, %v505
    %v507 = vrot.slane %v506, 2
    %v508 = vmax.f32 %v506, %v507
    %v509 = vrot.slane %v508, 1
    %v510 = vmax.f32 %v508, %v509
    %v511 = vsel %vm461, %v460, -inf
    %v512 = vrot.slane %v511, 4
    %v513 = vmax.f32 %v511, %v512
    %v514 = vrot.slane %v513, 2
    %v515 = vmax.f32 %v513, %v514
    %v516 = vrot.slane %v515, 1
    %v517 = vmax.f32 %v515, %v516
    %vm526 = vcmask 1041409
    %v527 = vsel %vm526, %v475, %v468
    %vm528 = vcmask 1042434
    %v529 = vsel %vm528, %v482, %v527
    %vm530 = vcmask 1043459
    %v531 = vsel %vm530, %v489, %v529
    %vm532 = vcmask 1044484
    %v533 = vsel %vm532, %v496, %v531
    %vm534 = vcmask 1045509
    %v535 = vsel %vm534, %v503, %v533
    %vm536 = vcmask 1046534
    %v537 = vsel %vm536, %v510, %v535
    %vm538 = vcmask 1047559
    %v539 = vsel %vm538, %v517, %v537
    %541 = vst.msk [vmem:[#allocation2] sm:$0xff] %vm461, %v539
    // Predicated region
    $region30: #{tpu_custom_call.1} parent=1 // pred_check
      _
    $region31: #{tpu_custom_call.1} parent=1 // pred_check_branch
      %543 = sbr.rel (0) target = $region33
    $region32: #{tpu_custom_call.1} parent=1 // pred_region
      %s545 = ssub.s32 128, 128
      %546 = vsyncadd [#allocation3], %s545
      %s548 = sshll.u32 [#allocation2], 4
      %s549 = int_to_ptr.vmem [resolvable:$true] %s548
      %551 = dma.vmem_to_hbm [thread:$0]  %s549, 128, %s7, [#allocation3]
    $region33: #{tpu_custom_call.1} parent=1 // pred_fallthru
      _
    // Predicated region
    $region34: #{tpu_custom_call.1} parent=1 // pred_check
      _
    $region35: #{tpu_custom_call.1} parent=1 // pred_check_branch
      %553 = sbr.rel (0) target = $region37
    $region36: #{tpu_custom_call.1} parent=1 // pred_region
      %554 = dma.done [#allocation3], 128
    $region37: #{tpu_custom_call.1} parent=1 // pred_fallthru
      _
    %555 = vsyncpa [#allocation3], 1

</llo_original>
